<compile_context>
chip_gen: v7x
topology: tpu7x:2x2x1
jax: 0.10.0
libtpu: 0.0.40
codegen_flags: <defaults>
</compile_context>

<pallas_src>
import functools
import math

import jax
import jax.numpy as jnp
from jax import lax
from jax.experimental import pallas as pl
from jax.experimental.pallas import tpu as pltpu


OFFSET_RANGE_FACTOR = 3.0
_VMEM_LIMIT = 64 * 1024 * 1024


def _cp(*sems):
    return pltpu.CompilerParams(dimension_semantics=sems, vmem_limit_bytes=_VMEM_LIMIT)


def _row_tile(n, cap=512):
    for t in (512, 256, 128, 64, 32, 16, 8):
        if t <= cap and n % t == 0:
            return t
    return n


def _col_tile(c, cap=512):
    if c <= cap:
        return c
    for t in (512, 384, 256, 128):
        if c % t == 0:
            return t
    return c


# ----------------------------------------------------------------------------
# In-kernel helpers
# ----------------------------------------------------------------------------
def _erf_approx(x):
    # Abramowitz & Stegun 7.1.26, |err| < 1.5e-7 (matches torch.nn.GELU erf form at f32).
    a1, a2, a3, a4, a5 = 0.254829592, -0.284496736, 1.421413741, -1.453152027, 1.061405429
    p = 0.3275911
    sign = jnp.sign(x)
    ax = jnp.abs(x)
    t = 1.0 / (1.0 + p * ax)
    poly = ((((a5 * t + a4) * t + a3) * t + a2) * t + a1) * t
    return sign * (1.0 - poly * jnp.exp(-ax * ax))


def _gelu(x):
    return 0.5 * x * (1.0 + _erf_approx(x * (1.0 / math.sqrt(2.0))))


# ----------------------------------------------------------------------------
# Row-tiled matmul kernels (1x1 convs) with optional fusions
# ----------------------------------------------------------------------------
def _matmul_kernel(x_ref, w_ref, b_ref, o_ref):
    acc = jnp.dot(x_ref[...], w_ref[...], preferred_element_type=jnp.float32)
    acc = acc + b_ref[...].astype(jnp.float32)
    o_ref[...] = acc.astype(o_ref.dtype)


def _matmul_res_kernel(x_ref, w_ref, b_ref, r_ref, o_ref):
    acc = jnp.dot(x_ref[...], w_ref[...], preferred_element_type=jnp.float32)
    acc = acc + b_ref[...].astype(jnp.float32) + r_ref[...].astype(jnp.float32)
    o_ref[...] = acc.astype(o_ref.dtype)


def _matmul_kv_kernel(x_ref, wk_ref, bk_ref, wv_ref, bv_ref, k_ref, v_ref):
    x = x_ref[...]
    k = jnp.dot(x, wk_ref[...], preferred_element_type=jnp.float32) + bk_ref[...].astype(jnp.float32)
    v = jnp.dot(x, wv_ref[...], preferred_element_type=jnp.float32) + bv_ref[...].astype(jnp.float32)
    k_ref[...] = k.astype(k_ref.dtype)
    v_ref[...] = v.astype(v_ref.dtype)


def _ln(x_f32, g_ref, b_ref, eps):
    mu = jnp.mean(x_f32, axis=-1, keepdims=True)
    xc = x_f32 - mu
    var = jnp.mean(xc * xc, axis=-1, keepdims=True)
    return xc * lax.rsqrt(var + eps) * g_ref[...].astype(jnp.float32) + b_ref[...].astype(jnp.float32)


def _ln_matmul_kernel(x_ref, g_ref, b_ref, w_ref, wb_ref, o_ref, *, eps):
    xn = _ln(x_ref[...].astype(jnp.float32), g_ref, b_ref, eps)
    acc = jnp.dot(xn.astype(w_ref.dtype), w_ref[...], preferred_element_type=jnp.float32)
    acc = acc + wb_ref[...].astype(jnp.float32)
    o_ref[...] = acc.astype(o_ref.dtype)


def _ln_matmul_dual_kernel(x_ref, g_ref, b_ref, w_ref, wb_ref, xn_ref, q_ref, *, eps):
    xn = _ln(x_ref[...].astype(jnp.float32), g_ref, b_ref, eps)
    xn_ref[...] = xn.astype(xn_ref.dtype)
    acc = jnp.dot(xn.astype(w_ref.dtype), w_ref[...], preferred_element_type=jnp.float32)
    acc = acc + wb_ref[...].astype(jnp.float32)
    q_ref[...] = acc.astype(q_ref.dtype)


def matmul(x2d, w, b):
    N, Cin = x2d.shape
    Cout = w.shape[1]
    tm, tn = _row_tile(N), _col_tile(Cout)
    return pl.pallas_call(
        _matmul_kernel,
        out_shape=jax.ShapeDtypeStruct((N, Cout), x2d.dtype),
        grid=(N // tm, Cout // tn),
        in_specs=[
            pl.BlockSpec((tm, Cin), lambda i, j: (i, 0)),
            pl.BlockSpec((Cin, tn), lambda i, j: (0, j)),
            pl.BlockSpec((1, tn), lambda i, j: (0, j)),
        ],
        out_specs=pl.BlockSpec((tm, tn), lambda i, j: (i, j)),
        compiler_params=_cp("parallel", "parallel"),
    )(x2d, w, b.reshape(1, Cout))


def matmul_residual(x2d, w, b, resid2d):
    N, Cin = x2d.shape
    Cout = w.shape[1]
    tm, tn = _row_tile(N), _col_tile(Cout)
    return pl.pallas_call(
        _matmul_res_kernel,
        out_shape=jax.ShapeDtypeStruct((N, Cout), resid2d.dtype),
        grid=(N // tm, Cout // tn),
        in_specs=[
            pl.BlockSpec((tm, Cin), lambda i, j: (i, 0)),
            pl.BlockSpec((Cin, tn), lambda i, j: (0, j)),
            pl.BlockSpec((1, tn), lambda i, j: (0, j)),
            pl.BlockSpec((tm, tn), lambda i, j: (i, j)),
        ],
        out_specs=pl.BlockSpec((tm, tn), lambda i, j: (i, j)),
        compiler_params=_cp("parallel", "parallel"),
    )(x2d, w, b.reshape(1, Cout), resid2d)


def matmul_kv(x2d, wk, bk, wv, bv):
    N, Cin = x2d.shape
    Cout = wk.shape[1]
    tm, tn = _row_tile(N), _col_tile(Cout)
    return pl.pallas_call(
        _matmul_kv_kernel,
        out_shape=(jax.ShapeDtypeStruct((N, Cout), x2d.dtype),
                   jax.ShapeDtypeStruct((N, Cout), x2d.dtype)),
        grid=(N // tm, Cout // tn),
        in_specs=[
            pl.BlockSpec((tm, Cin), lambda i, j: (i, 0)),
            pl.BlockSpec((Cin, tn), lambda i, j: (0, j)),
            pl.BlockSpec((1, tn), lambda i, j: (0, j)),
            pl.BlockSpec((Cin, tn), lambda i, j: (0, j)),
            pl.BlockSpec((1, tn), lambda i, j: (0, j)),
        ],
        out_specs=[pl.BlockSpec((tm, tn), lambda i, j: (i, j)),
                   pl.BlockSpec((tm, tn), lambda i, j: (i, j))],
        compiler_params=_cp("parallel", "parallel"),
    )(x2d, wk, bk.reshape(1, Cout), wv, bv.reshape(1, Cout))


def ln_matmul(x2d, gamma, beta, w, b, eps=1e-5):
    N, C = x2d.shape
    Cout = w.shape[1]
    tm, tn = _row_tile(N), _col_tile(Cout)
    return pl.pallas_call(
        functools.partial(_ln_matmul_kernel, eps=eps),
        out_shape=jax.ShapeDtypeStruct((N, Cout), x2d.dtype),
        grid=(N // tm, Cout // tn),
        in_specs=[
            pl.BlockSpec((tm, C), lambda i, j: (i, 0)),
            pl.BlockSpec((1, C), lambda i, j: (0, 0)),
            pl.BlockSpec((1, C), lambda i, j: (0, 0)),
            pl.BlockSpec((C, tn), lambda i, j: (0, j)),
            pl.BlockSpec((1, tn), lambda i, j: (0, j)),
        ],
        out_specs=pl.BlockSpec((tm, tn), lambda i, j: (i, j)),
        compiler_params=_cp("parallel", "parallel"),
    )(x2d, gamma.reshape(1, C), beta.reshape(1, C), w, b.reshape(1, Cout))


def ln_matmul_dual(x2d, gamma, beta, w, b, eps=1e-5):
    # LayerNorm fused with proj_q; also emits the normed activation (needed for sampling / K / V).
    N, C = x2d.shape
    Cout = w.shape[1]
    tm = _row_tile(N)
    return pl.pallas_call(
        functools.partial(_ln_matmul_dual_kernel, eps=eps),
        out_shape=(jax.ShapeDtypeStruct((N, C), x2d.dtype),
                   jax.ShapeDtypeStruct((N, Cout), x2d.dtype)),
        grid=(N // tm,),
        in_specs=[
            pl.BlockSpec((tm, C), lambda i: (i, 0)),
            pl.BlockSpec((1, C), lambda i: (0, 0)),
            pl.BlockSpec((1, C), lambda i: (0, 0)),
            pl.BlockSpec((C, Cout), lambda i: (0, 0)),
            pl.BlockSpec((1, Cout), lambda i: (0, 0)),
        ],
        out_specs=[pl.BlockSpec((tm, C), lambda i: (i, 0)),
                   pl.BlockSpec((tm, Cout), lambda i: (i, 0))],
        compiler_params=_cp("parallel"),
    )(x2d, gamma.reshape(1, C), beta.reshape(1, C), w, b.reshape(1, Cout))


# ----------------------------------------------------------------------------
# Depthwise 3x3 conv (stride 1, pad 1), optional fused GELU (MLP path)
# TODO(synk): row-strip tiling with halo for very large fmaps (v7x VMEM); full image per step here.
# ----------------------------------------------------------------------------
def _dwconv3x3_kernel(xp_ref, w_ref, b_ref, o_ref, *, apply_gelu):
    H, W, C = o_ref.shape[1], o_ref.shape[2], o_ref.shape[3]
    xp = xp_ref[0].astype(jnp.float32)            # (H+2, W+2, C)
    w = w_ref[...].astype(jnp.float32)            # (3, 3, C)
    acc = jnp.broadcast_to(b_ref[...].astype(jnp.float32).reshape(1, 1, C), (H, W, C))
    for dy in range(3):
        for dx in range(3):
            acc = acc + xp[dy:dy + H, dx:dx + W, :] * w[dy, dx, :]
    if apply_gelu:
        acc = _gelu(acc)
    o_ref[0] = acc.astype(o_ref.dtype)


def dwconv3x3(x_nhwc, w, b, apply_gelu=False):
    N, H, W, C = x_nhwc.shape
    xp = jnp.pad(x_nhwc, ((0, 0), (1, 1), (1, 1), (0, 0)))
    return pl.pallas_call(
        functools.partial(_dwconv3x3_kernel, apply_gelu=apply_gelu),
        out_shape=jax.ShapeDtypeStruct((N, H, W, C), x_nhwc.dtype),
        grid=(N,),
        in_specs=[
            pl.BlockSpec((1, H + 2, W + 2, C), lambda n: (n, 0, 0, 0)),
            pl.BlockSpec((3, 3, C), lambda n: (0, 0, 0)),
            pl.BlockSpec((1, C), lambda n: (0, 0)),
        ],
        out_specs=pl.BlockSpec((1, H, W, C), lambda n: (n, 0, 0, 0)),
        compiler_params=_cp("parallel"),
    )(xp, w, b.reshape(1, C))


# ----------------------------------------------------------------------------
# Offset network: (dwconv3x3 + LayerNorm + GELU) fused; then (1x1 Cg->2 + tanh + range + ref) fused
# ----------------------------------------------------------------------------
def _dw_ln_gelu_kernel(xp_ref, w_ref, b_ref, g_ref, bb_ref, o_ref, *, eps):
    H, W, Cg = o_ref.shape[1], o_ref.shape[2], o_ref.shape[3]
    xp = xp_ref[0].astype(jnp.float32)
    w = w_ref[...].astype(jnp.float32)
    acc = jnp.broadcast_to(b_ref[...].astype(jnp.float32).reshape(1, 1, Cg), (H, W, Cg))
    for dy in range(3):
        for dx in range(3):
            acc = acc + xp[dy:dy + H, dx:dx + W, :] * w[dy, dx, :]
    mu = jnp.mean(acc, axis=-1, keepdims=True)
    xc = acc - mu
    var = jnp.mean(xc * xc, axis=-1, keepdims=True)
    t = xc * lax.rsqrt(var + eps)
    t = t * g_ref[...].astype(jnp.float32).reshape(1, 1, Cg) + bb_ref[...].astype(jnp.float32).reshape(1, 1, Cg)
    o_ref[0] = _gelu(t).astype(o_ref.dtype)


def _offset_head_kernel(t_ref, w2_ref, o_ref, *, Hk, Wk, factor):
    tm = o_ref.shape[0]
    off = jnp.dot(t_ref[...].astype(jnp.float32), w2_ref[...].astype(jnp.float32),
                  preferred_element_type=jnp.float32)                       # (tm, 2), bias=False
    n_sample = Hk * Wk
    r = pl.program_id(0) * tm + lax.broadcasted_iota(jnp.int32, (tm, 2), 0)
    sp = r % n_sample
    yi = (sp // Wk).astype(jnp.float32)
    xi = (sp % Wk).astype(jnp.float32)
    lane = lax.broadcasted_iota(jnp.int32, (tm, 2), 1)
    is_y = lane == 0
    ref = jnp.where(is_y, (yi + 0.5) / Hk * 2.0 - 1.0, (xi + 0.5) / Wk * 2.0 - 1.0)
    # TODO(synk): some DAT variants scale by 1/Hk, 1/Wk instead of 1/(Hk-1), 1/(Wk-1).
    rng = jnp.where(is_y, factor / max(Hk - 1.0, 1.0), factor / max(Wk - 1.0, 1.0))
    pos = jnp.tanh(off) * rng + ref
    o_ref[...] = pos.astype(o_ref.dtype)


def offset_branch(q4d, p, B, H, W, groups, Cg, Hk, Wk, factor=OFFSET_RANGE_FACTOR):
    BG = B * groups
    q_off = (q4d.reshape(B, H, W, groups, Cg)
             .transpose(0, 3, 1, 2, 4).reshape(BG, H, W, Cg))
    qp = jnp.pad(q_off, ((0, 0), (1, 1), (1, 1), (0, 0)))
    t = pl.pallas_call(
        functools.partial(_dw_ln_gelu_kernel, eps=1e-5),
        out_shape=jax.ShapeDtypeStruct((BG, H, W, Cg), q4d.dtype),
        grid=(BG,),
        in_specs=[
            pl.BlockSpec((1, H + 2, W + 2, Cg), lambda n: (n, 0, 0, 0)),
            pl.BlockSpec((3, 3, Cg), lambda n: (0, 0, 0)),
            pl.BlockSpec((1, Cg), lambda n: (0, 0)),
            pl.BlockSpec((1, Cg), lambda n: (0, 0)),
            pl.BlockSpec((1, Cg), lambda n: (0, 0)),
        ],
        out_specs=pl.BlockSpec((1, H, W, Cg), lambda n: (n, 0, 0, 0)),
        compiler_params=_cp("parallel"),
    )(qp, p["off_dw_w"], p["off_dw_b"].reshape(1, Cg),
      p["off_ln_g"].reshape(1, Cg), p["off_ln_b"].reshape(1, Cg))

    NR = BG * H * W
    tm = _row_tile(NR)
    pos = pl.pallas_call(
        functools.partial(_offset_head_kernel, Hk=Hk, Wk=Wk, factor=factor),
        out_shape=jax.ShapeDtypeStruct((NR, 2), q4d.dtype),
        grid=(NR // tm,),
        in_specs=[
            pl.BlockSpec((tm, Cg), lambda i: (i, 0)),
            pl.BlockSpec((Cg, 2), lambda i: (0, 0)),
        ],
        out_specs=pl.BlockSpec((tm, 2), lambda i: (i, 0)),
        compiler_params=_cp("parallel"),
    )(t.reshape(NR, Cg), p["off_w2"])
    return pos.reshape(BG, Hk * Wk, 2)                         # (y, x) in [-1, 1]


# ----------------------------------------------------------------------------
# Bilinear grid_sample (align_corners=True, zero padding) as one-hot matmul on the MXU
# ----------------------------------------------------------------------------
def _grid_sample_kernel(pos_ref, img_ref, o_ref, *, H, W):
    pos = pos_ref[0].astype(jnp.float32)                       # (ts, 2)  (y, x)
    img = img_ref[0]                                            # (HW, Cg)
    ts = pos.shape[0]
    HW = img.shape[0]
    lane = lax.broadcasted_iota(jnp.int32, (ts, 2), 1)
    is_y = (lane == 0).astype(jnp.float32)
    gy = jnp.sum(pos * is_y, axis=-1, keepdims=True)           # (ts, 1)
    gx = jnp.sum(pos * (1.0 - is_y), axis=-1, keepdims=True)
    gy = (gy + 1.0) * 0.5 * (H - 1)                             # align_corners=True
    gx = (gx + 1.0) * 0.5 * (W - 1)
    y0 = jnp.floor(gy)
    x0 = jnp.floor(gx)
    wy1 = gy - y0
    wx1 = gx - x0
    cols = lax.broadcasted_iota(jnp.int32, (ts, HW), 1)
    wmat = jnp.zeros((ts, HW), jnp.float32)
    for iy, ix, wgt in (
        (y0, x0, (1.0 - wy1) * (1.0 - wx1)),
        (y0, x0 + 1.0, (1.0 - wy1) * wx1),
        (y0 + 1.0, x0, wy1 * (1.0 - wx1)),
        (y0 + 1.0, x0 + 1.0, wy1 * wx1),
    ):
        valid = (ix >= 0.0) & (ix <= W - 1.0) & (iy >= 0.0) & (iy <= H - 1.0)
        iyc = jnp.clip(iy, 0.0, H - 1.0).astype(jnp.int32)
        ixc = jnp.clip(ix, 0.0, W - 1.0).astype(jnp.int32)
        idx = iyc * W + ixc                                     # (ts, 1)
        onehot = (cols == idx).astype(jnp.float32)              # (ts, HW)
        wmat = wmat + onehot * (wgt * valid.astype(jnp.float32))
    o_ref[0] = jnp.dot(wmat, img.astype(jnp.float32),
                       preferred_element_type=jnp.float32).astype(o_ref.dtype)


def grid_sample(pos, img, H, W):
    BG, n_sample, _ = pos.shape
    HW, Cg = img.shape[1], img.shape[2]
    ts = _row_tile(n_sample, 256)
    return pl.pallas_call(
        functools.partial(_grid_sample_kernel, H=H, W=W),
        out_shape=jax.ShapeDtypeStruct((BG, n_sample, Cg), img.dtype),
        grid=(BG, n_sample // ts),
        in_specs=[
            pl.BlockSpec((1, ts, 2), lambda i, s: (i, s, 0)),
            pl.BlockSpec((1, HW, Cg), lambda i, s: (i, 0, 0)),
        ],
        out_specs=pl.BlockSpec((1, ts, Cg), lambda i, s: (i, s, 0)),
        compiler_params=_cp("parallel", "parallel"),
    )(pos, img)


# ----------------------------------------------------------------------------
# Flash-style attention: kv-tiled online softmax, all heads packed per grid step
# ----------------------------------------------------------------------------
def _flash_attn_kernel(q_ref, k_ref, v_ref, o_ref, m_ref, l_ref, acc_ref, *, scale):
    ki = pl.program_id(2)

    @pl.when(ki == 0)
    def _():
        m_ref[...] = jnp.full_like(m_ref, -jnp.inf)
        l_ref[...] = jnp.zeros_like(l_ref)
        acc_ref[...] = jnp.zeros_like(acc_ref)

    q = q_ref[0]                                                 # (heads, tq, hc)
    k = k_ref[0]                                                 # (heads, tk, hc)
    v = v_ref[0]                                                 # (heads, tk, hc)
    s = jnp.einsum("hqd,hkd->hqk", q, k,
                   preferred_element_type=jnp.float32) * scale   # (heads, tq, tk)
    m_prev = m_ref[...]
    m_new = jnp.maximum(m_prev, jnp.max(s, axis=-1, keepdims=True))
    alpha = jnp.exp(m_prev - m_new)
    p = jnp.exp(s - m_new)
    l_ref[...] = alpha * l_ref[...] + jnp.sum(p, axis=-1, keepdims=True)
    pv = jnp.einsum("hqk,hkd->hqd", p.astype(v.dtype), v,
                    preferred_element_type=jnp.float32)          # (heads, tq, hc)
    acc_ref[...] = alpha * acc_ref[...] + pv
    m_ref[...] = m_new

    @pl.when(ki == pl.num_programs(2) - 1)
    def _():
        o_ref[0] = (acc_ref[...] *
                    pl.reciprocal(l_ref[...], approx=True)).astype(o_ref.dtype)


def flash_attention(qh, kh, vh, scale):
    B, heads, M, hc = qh.shape
    Ns = kh.shape[2]
    tq = _row_tile(M, 256)
    tk = _row_tile(Ns, 512)
    return pl.pallas_call(
        functools.partial(_flash_attn_kernel, scale=scale),
        out_shape=jax.ShapeDtypeStruct((B, heads, M, hc), qh.dtype),
        grid=(B, M // tq, Ns // tk),
        in_specs=[
            pl.BlockSpec((1, heads, tq, hc), lambda b, qi, ki: (b, 0, qi, 0)),
            pl.BlockSpec((1, heads, tk, hc), lambda b, qi, ki: (b, 0, ki, 0)),
            pl.BlockSpec((1, heads, tk, hc), lambda b, qi, ki: (b, 0, ki, 0)),
        ],
        out_specs=pl.BlockSpec((1, heads, tq, hc), lambda b, qi, ki: (b, 0, qi, 0)),
        scratch_shapes=[
            pltpu.VMEM((heads, tq, 1), jnp.float32),
            pltpu.VMEM((heads, tq, 1), jnp.float32),
            pltpu.VMEM((heads, tq, hc), jnp.float32),
        ],
        compiler_params=_cp("parallel", "parallel", "arbitrary"),
    )(qh, kh, vh)


# ----------------------------------------------------------------------------
# Reference points (tiny; plain JAX, iota-based)
# ----------------------------------------------------------------------------
def get_ref_points(Hk, Wk, Bg, dtype):
    ref_y = (jnp.linspace(0.5, Hk - 0.5, Hk, dtype=dtype) / Hk) * 2.0 - 1.0
    ref_x = (jnp.linspace(0.5, Wk - 0.5, Wk, dtype=dtype) / Wk) * 2.0 - 1.0
    ry, rx = jnp.meshgrid(ref_y, ref_x, indexing="ij")
    ref = jnp.stack([ry, rx], axis=-1)                          # (Hk, Wk, 2) -> (y, x)
    return jnp.broadcast_to(ref[None], (Bg, Hk, Wk, 2))


# ----------------------------------------------------------------------------
# Module forward (glue around Pallas kernels)
# ----------------------------------------------------------------------------
def dattention_forward(x, blk, B, H, W, C, heads, groups):
    p = blk["attn"]
    hc = C // heads
    Cg = C // groups
    scale = hc ** -0.5
    N = B * H * W
    M = H * W
    Hk, Wk = H, W
    n_sample = Hk * Wk

    x2d = x.reshape(N, C)
    # LayerNorm (pre-attn) fused with proj_q; also emits the normed activation once.
    xn2d, q2d = ln_matmul_dual(x2d, blk["ln0_g"], blk["ln0_b"], p["wq"], p["bq"])

    # Offset network -> sampling positions (fully fused, 2 kernels).
    pos = offset_branch(q2d.reshape(B, H, W, C), p, B, H, W, groups, Cg, Hk, Wk)

    # Deformable bilinear sampling of the normed feature map (one-hot matmul, no XLA gather).
    xn_grp = (xn2d.reshape(B, H, W, groups, Cg)
              .transpose(0, 3, 1, 2, 4).reshape(B * groups, H * W, Cg))
    x_sampled = grid_sample(pos, xn_grp, H, W)                   # (B*G, n_sample, Cg)
    x_sampled = (x_sampled.reshape(B, groups, n_sample, Cg)
                 .transpose(0, 2, 1, 3).reshape(B * n_sample, C))

    # K / V projections fused (x_sampled streamed once).
    k2d, v2d = matmul_kv(x_sampled, p["wk"], p["bk"], p["wv"], p["bv"])

    # Flash-style multi-head attention (heads packed per grid step).
    qh = q2d.reshape(B, M, heads, hc).transpose(0, 2, 1, 3)
    kh = k2d.reshape(B, n_sample, heads, hc).transpose(0, 2, 1, 3)
    vh = v2d.reshape(B, n_sample, heads, hc).transpose(0, 2, 1, 3)
    oh = flash_attention(qh, kh, vh, scale)                      # (B, heads, M, hc)
    out2d = oh.transpose(0, 2, 1, 3).reshape(N, C)

    # proj_out fused with the residual add (attn_drop / proj_drop / DropPath = identity in eval).
    y = matmul_residual(out2d, p["wo"], p["bo"], x2d).reshape(B, H, W, C)

    reference = get_ref_points(Hk, Wk, B * groups, x.dtype)
    return (y, pos.reshape(B, groups, Hk, Wk, 2),
            reference.reshape(B, groups, Hk, Wk, 2))


def mlp_forward(x, blk, B, H, W, C, expansion):
    m = blk["mlp"]
    C2 = C * expansion
    N = B * H * W
    x2d = x.reshape(N, C)
    h = ln_matmul(x2d, blk["ln1_g"], blk["ln1_b"], m["w1"], m["b1"])        # LN + linear1 fused
    h = dwconv3x3(h.reshape(B, H, W, C2), m["dw_w"], m["dw_b"], apply_gelu=True)
    y = matmul_residual(h.reshape(N, C2), m["w2"], m["b2"], x2d)            # linear2 + residual fused
    return y.reshape(B, H, W, C)


def transformer_stage_forward(x_nchw, params):
    B, Cin, H, W = x_nchw.shape
    x = jnp.transpose(x_nchw, (0, 2, 3, 1))                                  # NCHW -> NHWC
    if params["proj_w"] is not None:
        C = params["proj_w"].shape[1]
        x = matmul(x.reshape(B * H * W, Cin), params["proj_w"], params["proj_b"]).reshape(B, H, W, C)
    else:
        C = Cin

    positions, references = [], []
    for d in range(params["depths"]):
        blk = params["blocks"][d]
        x, pos, ref = dattention_forward(x, blk, B, H, W, C,
                                         params["heads"], params["groups"])
        x = mlp_forward(x, blk, B, H, W, C, params["expansion"])
        positions.append(pos)
        references.append(ref)
    return jnp.transpose(x, (0, 3, 1, 2)), positions, references            # NHWC -> NCHW


# ----------------------------------------------------------------------------
# Deterministic parameter init (synthetic; shapes follow the PyTorch __init__)
# ----------------------------------------------------------------------------
def init_params(key, dim_in, dim_embed, heads, groups, depths, expansion):
    Cg = dim_embed // groups
    C2 = dim_embed * expansion
    keys = jax.random.split(key, 128)
    ki = iter(keys)

    def nrm(shape, s=0.05):
        return jax.random.normal(next(ki), shape, jnp.float32) * s

    params = {
        "depths": depths, "heads": heads, "groups": groups, "expansion": expansion,
        "proj_w": nrm((dim_in, dim_embed)) if dim_in != dim_embed else None,
        "proj_b": nrm((dim_embed,), 0.01) if dim_in != dim_embed else None,
        "blocks": [],
    }
    for _ in range(depths):
        params["blocks"].append({
            "ln0_g": jnp.ones((dim_embed,), jnp.float32), "ln0_b": jnp.zeros((dim_embed,), jnp.float32),
            "ln1_g": jnp.ones((dim_embed,), jnp.float32), "ln1_b": jnp.zeros((dim_embed,), jnp.float32),
            "attn": {
                "wq": nrm((dim_embed, dim_embed)), "bq": nrm((dim_embed,), 0.01),
                "wk": nrm((dim_embed, dim_embed)), "bk": nrm((dim_embed,), 0.01),
                "wv": nrm((dim_embed, dim_embed)), "bv": nrm((dim_embed,), 0.01),
                "wo": nrm((dim_embed, dim_embed)), "bo": nrm((dim_embed,), 0.01),
                "off_dw_w": nrm((3, 3, Cg)), "off_dw_b": nrm((Cg,), 0.01),
                "off_ln_g": jnp.ones((Cg,), jnp.float32), "off_ln_b": jnp.zeros((Cg,), jnp.float32),
                "off_w2": nrm((Cg, 2)),                                      # 1x1 conv, bias=False
            },
            "mlp": {
                "w1": nrm((dim_embed, C2)), "b1": nrm((C2,), 0.01),
                "dw_w": nrm((3, 3, C2)), "dw_b": nrm((C2,), 0.01),
                "w2": nrm((C2, dim_embed)), "b2": nrm((dim_embed,), 0.01),
            },
        })
    return params


# ----------------------------------------------------------------------------
if __name__ == "__main__":
    key = jax.random.PRNGKey(0)
    k_in, k_par = jax.random.split(key)

    # small shapes consistent with the module: fmap 8x8, dim_in 16 -> dim_embed 32,
    # heads=4 (hc=8), n_groups=4, depths=1, expansion=2
    B, dim_in, H, W = 2, 16, 8, 8
    dim_embed, heads, groups, depths, expansion = 32, 4, 4, 1, 2

    x = jax.random.normal(k_in, (B, dim_in, H, W), jnp.float32)             # NCHW (PyTorch convention)
    params = init_params(k_par, dim_in, dim_embed, heads, groups, depths, expansion)

    y, positions, references = transformer_stage_forward(x, params)
    y = jax.block_until_ready(y)
    positions = [jax.block_until_ready(p) for p in positions]
    references = [jax.block_until_ready(r) for r in references]

    assert y.shape == (B, dim_embed, H, W)
    assert positions[0].shape == (B, groups, H, W, 2)
    assert references[0].shape == (B, groups, H, W, 2)
    assert bool(jnp.all(jnp.isfinite(y)))
    assert bool(jnp.all(jnp.isfinite(positions[0])))
    print("KERNEL_OK")
</pallas_src>

<mosaic_0001>
module attributes {stable_mosaic.version = 11 : i64} {
  func.func @_matmul_kernel(%arg0: i32, %arg1: i32, %arg2: memref<128x16xf32, #tpu.memory_space<vmem>>, %arg3: memref<16x32xf32, #tpu.memory_space<vmem>>, %arg4: memref<1x32xf32, #tpu.memory_space<vmem>>, %arg5: memref<128x32xf32, #tpu.memory_space<vmem>>) attributes {dimension_semantics = [#tpu.dimension_semantics<parallel>, #tpu.dimension_semantics<parallel>], iteration_bounds = array<i64: 1, 1>, scalar_prefetch = 0 : i64, scratch_operands = 0 : i64, tpu.core_type = #tpu.core_type<tc>, window_params = [{transform_indices = @transform_0, window_bounds = array<i64: 128, 16>}, {transform_indices = @transform_1, window_bounds = array<i64: 16, 32>}, {transform_indices = @transform_2, window_bounds = array<i64: 1, 32>}, {transform_indices = @transform_3, window_bounds = array<i64: 128, 32>}]} {
    %c0 = arith.constant 0 : index
    %c0_0 = arith.constant 0 : index
    %0 = vector.load %arg2[%c0, %c0_0] : memref<128x16xf32, #tpu.memory_space<vmem>>, vector<128x16xf32>
    %c0_1 = arith.constant 0 : index
    %c0_2 = arith.constant 0 : index
    %1 = vector.load %arg3[%c0_1, %c0_2] : memref<16x32xf32, #tpu.memory_space<vmem>>, vector<16x32xf32>
    %cst = arith.constant dense<0.000000e+00> : vector<128x32xf32>
    %2 = tpu.matmul %0, %1, %cst {dimension_numbers = #tpu.dot_dimension_numbers<[1], [0], [0], [1], [0, 0, 1, 1], [], []>} : vector<128x16xf32>, vector<16x32xf32>, vector<128x32xf32> -> vector<128x32xf32>
    %c0_3 = arith.constant 0 : index
    %c0_4 = arith.constant 0 : index
    %3 = vector.load %arg4[%c0_3, %c0_4] : memref<1x32xf32, #tpu.memory_space<vmem>>, vector<1x32xf32>
    %4 = vector.broadcast %3 : vector<1x32xf32> to vector<128x32xf32>
    %5 = arith.addf %2, %4 : vector<128x32xf32>
    %c0_5 = arith.constant 0 : index
    %c0_6 = arith.constant 0 : index
    %6 = vector.load %arg5[%c0_5, %c0_6] : memref<128x32xf32, #tpu.memory_space<vmem>>, vector<128x32xf32>
    tpu.vector_store %arg5[%c0_5, %c0_6], %5 {strides = array<i32>} : memref<128x32xf32, #tpu.memory_space<vmem>>, vector<128x32xf32>,
    return
  }
  func.func @transform_0(%arg0: i32, %arg1: i32) -> (i32, i32) {
    %c0_i32 = arith.constant 0 : i32
    %c0_i32_0 = arith.constant 0 : i32
    return %arg0, %c0_i32 : i32, i32
  }
  func.func @transform_1(%arg0: i32, %arg1: i32) -> (i32, i32) {
    %c0_i32 = arith.constant 0 : i32
    %c0_i32_0 = arith.constant 0 : i32
    return %c0_i32, %arg1 : i32, i32
  }
  func.func @transform_2(%arg0: i32, %arg1: i32) -> (i32, i32) {
    %c0_i32 = arith.constant 0 : i32
    %c0_i32_0 = arith.constant 0 : i32
    return %c0_i32, %arg1 : i32, i32
  }
  func.func @transform_3(%arg0: i32, %arg1: i32) -> (i32, i32) {
    %c0_i32 = arith.constant 0 : i32
    return %arg0, %arg1 : i32, i32
  }
}

</mosaic_0001>

<llo_original>
// kernel: tpu_custom_call.1
$region0: #{tpu_custom_call.1}
  #allocation0 [shape = 'u32[]', space=smem, size = 0x4, offset = 0x4, fixed_abs, tag = 'smem constant byte address 0x4 - core index']
  #allocation1 [shape = 'u32[144,128]{1,0:T(1,128)}', space=vmem, size = 0x12000, scoped, tag = 'internal scratch']
  %s0 = inlined_call_operand.hbm [shape: f32[128,16], index: 0, kind: input, shape index: {}]
  %s1 = inlined_call_operand.hbm [shape: f32[16,32], index: 1, kind: input, shape index: {}]
  %s2 = inlined_call_operand.hbm [shape: f32[1,32], index: 2, kind: input, shape index: {}]
  %s3 = inlined_call_operand.hbm [shape: f32[128,32], index: 3, kind: output, shape index: {}]
  %s4 = sld [smem:[#allocation0]]
  $region34: #{tpu_custom_call.1} parent=0
    _
  %s6 = ssub.s32 1, %s4
  %s7 = scalar_select 0, %s6, %s4
  $region1: #{tpu_custom_call.1} parent=0
    #allocation2 [shape = 'u8[65536]{0}', space=vmem, size = 0x10000, scoped, tag = 'input window, operand 0, single buffered']
    #allocation3 [shape = 's32[1]{0}', space=sflag, size = 0x4, scoped, tag = 'scoped memory for tpu_custom_call.1']
    #allocation4 [shape = 's32[1]{0}', space=sflag, size = 0x4, scoped, tag = 'scoped memory for tpu_custom_call.1']
    #allocation5 [shape = 'u8[8192]{0}', space=vmem, size = 0x2000, scoped, tag = 'input window, operand 1, single buffered']
    #allocation6 [shape = 's32[1]{0}', space=sflag, size = 0x4, scoped, tag = 'scoped memory for tpu_custom_call.1']
    #allocation7 [shape = 'u8[512]{0}', space=vmem, size = 0x400, scoped, tag = 'input window, operand 2, single buffered']
    #allocation8 [shape = 'u8[65536]{0}', space=vmem, size = 0x10000, scoped, tag = 'output window, operand 0, single buffered']
    %8 = vsyncpa [#allocation3], 0
    %9 = vsyncpa [#allocation6], 0
    %10 = vsyncpa [#allocation4], 0
    // Predicated region
    $region2: #{tpu_custom_call.1} parent=1 // pred_check
      _
    $region3: #{tpu_custom_call.1} parent=1 // pred_check_branch
      %12 = sbr.rel (0) target = $region5
    $region4: #{tpu_custom_call.1} parent=1 // pred_region
      %s14 = ssub.s32 2048, 2048
      %15 = vsyncadd [#allocation3], %s14
      %s16 = sshll.u32 [#allocation2], 4
      %s17 = int_to_ptr.vmem [resolvable:$true] %s16
      %22 = dma.hbm_to_vmem [thread:$0]  %s0, 2048, %s17, [#allocation3], 128, 128, 8
    $region5: #{tpu_custom_call.1} parent=1 // pred_fallthru
      _
    // Predicated region
    $region6: #{tpu_custom_call.1} parent=1 // pred_check
      _
    $region7: #{tpu_custom_call.1} parent=1 // pred_check_branch
      %24 = sbr.rel (0) target = $region9
    $region8: #{tpu_custom_call.1} parent=1 // pred_region
      %s26 = ssub.s32 256, 256
      %27 = vsyncadd [#allocation6], %s26
      %s28 = sshll.u32 [#allocation5], 4
      %s29 = int_to_ptr.vmem [resolvable:$true] %s28
      %34 = dma.hbm_to_vmem [thread:$0]  %s1, 256, %s29, [#allocation6], 128, 128, 8
    $region9: #{tpu_custom_call.1} parent=1 // pred_fallthru
      _
    // Predicated region
    $region10: #{tpu_custom_call.1} parent=1 // pred_check
      _
    $region11: #{tpu_custom_call.1} parent=1 // pred_check_branch
      %36 = sbr.rel (0) target = $region13
    $region12: #{tpu_custom_call.1} parent=1 // pred_region
      %s38 = ssub.s32 16, 16
      %39 = vsyncadd [#allocation6], %s38
      %s41 = sshll.u32 [#allocation7], 4
      %s42 = int_to_ptr.vmem [resolvable:$true] %s41
      %44 = dma.hbm_to_vmem [thread:$0]  %s2, 16, %s42, [#allocation6]
    $region13: #{tpu_custom_call.1} parent=1 // pred_fallthru
      _
    // Predicated region
    $region14: #{tpu_custom_call.1} parent=1 // pred_check
      _
    $region15: #{tpu_custom_call.1} parent=1 // pred_check_branch
      %46 = sbr.rel (0) target = $region17
    $region16: #{tpu_custom_call.1} parent=1 // pred_region
      %47 = dma.done [#allocation3], 2048
    $region17: #{tpu_custom_call.1} parent=1 // pred_fallthru
      _
    // Predicated region
    $region18: #{tpu_custom_call.1} parent=1 // pred_check
      _
    $region19: #{tpu_custom_call.1} parent=1 // pred_check_branch
      %49 = sbr.rel (0) target = $region21
    $region20: #{tpu_custom_call.1} parent=1 // pred_region
      %50 = dma.done [#allocation6], 256
    $region21: #{tpu_custom_call.1} parent=1 // pred_fallthru
      _
    // Predicated region
    $region22: #{tpu_custom_call.1} parent=1 // pred_check
      _
    $region23: #{tpu_custom_call.1} parent=1 // pred_check_branch
      %52 = sbr.rel (0) target = $region25
    $region24: #{tpu_custom_call.1} parent=1 // pred_region
      %53 = dma.done [#allocation6], 16
    $region25: #{tpu_custom_call.1} parent=1 // pred_fallthru
      _
    %v54 = vld [vmem:[#allocation2] sm:$0xff]
    %v55 = vld [vmem:[#allocation2 + $0x8] sm:$0xff]
    %v56 = vld [vmem:[#allocation2 + $0x10] sm:$0xff]
    %v57 = vld [vmem:[#allocation2 + $0x18] sm:$0xff]
    %v58 = vld [vmem:[#allocation2 + $0x20] sm:$0xff]
    %v59 = vld [vmem:[#allocation2 + $0x28] sm:$0xff]
    %v60 = vld [vmem:[#allocation2 + $0x30] sm:$0xff]
    %v61 = vld [vmem:[#allocation2 + $0x38] sm:$0xff]
    %v62 = vld [vmem:[#allocation2 + $0x40] sm:$0xff]
    %v63 = vld [vmem:[#allocation2 + $0x48] sm:$0xff]
    %v64 = vld [vmem:[#allocation2 + $0x50] sm:$0xff]
    %v65 = vld [vmem:[#allocation2 + $0x58] sm:$0xff]
    %v66 = vld [vmem:[#allocation2 + $0x60] sm:$0xff]
    %v67 = vld [vmem:[#allocation2 + $0x68] sm:$0xff]
    %v68 = vld [vmem:[#allocation2 + $0x70] sm:$0xff]
    %v69 = vld [vmem:[#allocation2 + $0x78] sm:$0xff]
    %v70 = vld [vmem:[#allocation5] sm:$0xff]
    %v71 = vld [vmem:[#allocation5 + $0x8] sm:$0xff]
    %v72 = vld [vmem:[#allocation7] sm:$0x1]
    %v74 = vlaneseq
    %v75 = vshrl.u32 %v74, 7
    %v76 = vsub.s32 0, %v75
    %v77 = vrot.slane %v72, %v76
    %vm79 = vcmask 130048
    %v81 = vsel %vm79, %v54, 0
    %v84 = vsel %vm79, %v55, 0
    %v87 = vsel %vm79, %v56, 0
    %v90 = vsel %vm79, %v57, 0
    %v93 = vsel %vm79, %v58, 0
    %v96 = vsel %vm79, %v59, 0
    %v99 = vsel %vm79, %v60, 0
    %v102 = vsel %vm79, %v61, 0
    %v105 = vsel %vm79, %v62, 0
    %v108 = vsel %vm79, %v63, 0
    %v111 = vsel %vm79, %v64, 0
    %v114 = vsel %vm79, %v65, 0
    %v117 = vsel %vm79, %v66, 0
    %v120 = vsel %vm79, %v67, 0
    %v123 = vsel %vm79, %v68, 0
    %v126 = vsel %vm79, %v69, 0
    %128 = vmatprep.subr.mxu0 0.0
    %129 = vmatpush1.msra.mxu0 %v70
    %130 = vmatprep.subr.mxu0 0.0
    %131 = vmatpush1.msra.mxu0 %v71
    %132 = vmatprep.subr.mxu0 0.0
    %133 = vmatpush1.msra.mxu0 0.0
    %134 = vmatprep.subr.mxu0 0.0
    %135 = vmatpush1.msra.mxu0 0.0
    %136 = vmatprep.subr.mxu0 0.0
    %137 = vmatpush1.msra.mxu0 0.0
    %138 = vmatprep.subr.mxu0 0.0
    %139 = vmatpush1.msra.mxu0 0.0
    %140 = vmatprep.subr.mxu0 0.0
    %141 = vmatpush1.msra.mxu0 0.0
    %142 = vmatprep.subr.mxu0 0.0
    %143 = vmatpush1.msra.mxu0 0.0
    %144 = vmatprep.subr.mxu0 0.0
    %145 = vmatpush1.msra.mxu0 0.0
    %146 = vmatprep.subr.mxu0 0.0
    %147 = vmatpush1.msra.mxu0 0.0
    %148 = vmatprep.subr.mxu0 0.0
    %149 = vmatpush1.msra.mxu0 0.0
    %150 = vmatprep.subr.mxu0 0.0
    %151 = vmatpush1.msra.mxu0 0.0
    %152 = vmatprep.subr.mxu0 0.0
    %153 = vmatpush1.msra.mxu0 0.0
    %154 = vmatprep.subr.mxu0 0.0
    %155 = vmatpush1.msra.mxu0 0.0
    %156 = vmatprep.subr.mxu0 0.0
    %157 = vmatpush1.msra.mxu0 0.0
    %158 = vmatprep.subr.mxu0 0.0
    %159 = vmatpush1.msra.mxu0 0.0
    %160 = vmatprep.subr.mxu0 0.0
    %161 = vmatpush1.msra.mxu0 0.0
    %162 = vmatprep.subr.mxu0 0.0
    %163 = vmatpush1.msra.mxu0 0.0
    %164 = vmatprep.subr.mxu0 0.0
    %165 = vmatpush1.msra.mxu0 0.0
    %166 = vmatprep.subr.mxu0 0.0
    %167 = vmatpush1.msra.mxu0 0.0
    %168 = vmatprep.subr.mxu0 0.0
    %169 = vmatpush1.msra.mxu0 0.0
    %170 = vmatprep.subr.mxu0 0.0
    %171 = vmatpush1.msra.mxu0 0.0
    %172 = vmatprep.subr.mxu0 0.0
    %173 = vmatpush1.msra.mxu0 0.0
    %174 = vmatprep.subr.mxu0 0.0
    %175 = vmatpush1.msra.mxu0 0.0
    %176 = vmatprep.subr.mxu0 0.0
    %177 = vmatpush1.msra.mxu0 0.0
    %178 = vmatprep.subr.mxu0 0.0
    %179 = vmatpush1.msra.mxu0 0.0
    %180 = vmatprep.subr.mxu0 0.0
    %181 = vmatpush1.msra.mxu0 0.0
    %182 = vmatprep.subr.mxu0 0.0
    %183 = vmatpush1.msra.mxu0 0.0
    %184 = vmatprep.subr.mxu0 0.0
    %185 = vmatpush1.msra.mxu0 0.0
    %186 = vmatprep.subr.mxu0 0.0
    %187 = vmatpush1.msra.mxu0 0.0
    %188 = vmatprep.subr.mxu0 0.0
    %189 = vmatpush1.msra.mxu0 0.0
    %190 = vmatprep.subr.mxu0 0.0
    %191 = vmatpush1.msra.mxu0 0.0
    %192 = vmatprep.mubr.f32.mxu0 0.0
    %193 = vmatmul.mubr.f32.gmra.mrb[0].mxu0 %v81
    %v194 = vpop.f32.mrb[0].mxu0
    %v195 = vadd.f32 %v77, %v194
    %v196 = vpop.f32.mrb[0].mxu0
    %197 = vmatprep.mubr.f32.mxu0 0.0
    %198 = vmatmul.mubr.f32.gmra.mrb[0].mxu0 %v84
    %v199 = vpop.f32.mrb[0].mxu0
    %v200 = vadd.f32 %v77, %v199
    %v201 = vpop.f32.mrb[0].mxu0
    %202 = vmatprep.mubr.f32.mxu0 0.0
    %203 = vmatmul.mubr.f32.gmra.mrb[0].mxu0 %v87
    %v204 = vpop.f32.mrb[0].mxu0
    %v205 = vadd.f32 %v77, %v204
    %v206 = vpop.f32.mrb[0].mxu0
    %207 = vmatprep.mubr.f32.mxu0 0.0
    %208 = vmatmul.mubr.f32.gmra.mrb[0].mxu0 %v90
    %v209 = vpop.f32.mrb[0].mxu0
    %v210 = vadd.f32 %v77, %v209
    %v211 = vpop.f32.mrb[0].mxu0
    %212 = vmatprep.mubr.f32.mxu0 0.0
    %213 = vmatmul.mubr.f32.gmra.mrb[0].mxu0 %v93
    %v214 = vpop.f32.mrb[0].mxu0
    %v215 = vadd.f32 %v77, %v214
    %v216 = vpop.f32.mrb[0].mxu0
    %217 = vmatprep.mubr.f32.mxu0 0.0
    %218 = vmatmul.mubr.f32.gmra.mrb[0].mxu0 %v96
    %v219 = vpop.f32.mrb[0].mxu0
    %v220 = vadd.f32 %v77, %v219
    %v221 = vpop.f32.mrb[0].mxu0
    %222 = vmatprep.mubr.f32.mxu0 0.0
    %223 = vmatmul.mubr.f32.gmra.mrb[0].mxu0 %v99
    %v224 = vpop.f32.mrb[0].mxu0
    %v225 = vadd.f32 %v77, %v224
    %v226 = vpop.f32.mrb[0].mxu0
    %227 = vmatprep.mubr.f32.mxu0 0.0
    %228 = vmatmul.mubr.f32.gmra.mrb[0].mxu0 %v102
    %v229 = vpop.f32.mrb[0].mxu0
    %v230 = vadd.f32 %v77, %v229
    %v231 = vpop.f32.mrb[0].mxu0
    %232 = vmatprep.mubr.f32.mxu0 0.0
    %233 = vmatmul.mubr.f32.gmra.mrb[0].mxu0 %v105
    %v234 = vpop.f32.mrb[0].mxu0
    %v235 = vadd.f32 %v77, %v234
    %v236 = vpop.f32.mrb[0].mxu0
    %237 = vmatprep.mubr.f32.mxu0 0.0
    %238 = vmatmul.mubr.f32.gmra.mrb[0].mxu0 %v108
    %v239 = vpop.f32.mrb[0].mxu0
    %v240 = vadd.f32 %v77, %v239
    %v241 = vpop.f32.mrb[0].mxu0
    %242 = vmatprep.mubr.f32.mxu0 0.0
    %243 = vmatmul.mubr.f32.gmra.mrb[0].mxu0 %v111
    %v244 = vpop.f32.mrb[0].mxu0
    %v245 = vadd.f32 %v77, %v244
    %v246 = vpop.f32.mrb[0].mxu0
    %247 = vmatprep.mubr.f32.mxu0 0.0
    %248 = vmatmul.mubr.f32.gmra.mrb[0].mxu0 %v114
    %v249 = vpop.f32.mrb[0].mxu0
    %v250 = vadd.f32 %v77, %v249
    %v251 = vpop.f32.mrb[0].mxu0
    %252 = vmatprep.mubr.f32.mxu0 0.0
    %253 = vmatmul.mubr.f32.gmra.mrb[0].mxu0 %v117
    %v254 = vpop.f32.mrb[0].mxu0
    %v255 = vadd.f32 %v77, %v254
    %v256 = vpop.f32.mrb[0].mxu0
    %257 = vmatprep.mubr.f32.mxu0 0.0
    %258 = vmatmul.mubr.f32.gmra.mrb[0].mxu0 %v120
    %v259 = vpop.f32.mrb[0].mxu0
    %v260 = vadd.f32 %v77, %v259
    %v261 = vpop.f32.mrb[0].mxu0
    %262 = vmatprep.mubr.f32.mxu0 0.0
    %263 = vmatmul.mubr.f32.gmra.mrb[0].mxu0 %v123
    %v264 = vpop.f32.mrb[0].mxu0
    %v265 = vadd.f32 %v77, %v264
    %v266 = vpop.f32.mrb[0].mxu0
    %267 = vmatprep.mubr.f32.mxu0 0.0
    %268 = vmatmul.mubr.f32.gmra.mrb[0].mxu0 %v126
    %v269 = vpop.f32.mrb[0].mxu0
    %v270 = vadd.f32 %v77, %v269
    %v271 = vpop.f32.mrb[0].mxu0
    %272 = vdwg.mxu0
    %vm273 = vcmask 261120
    %274 = vst.msk [vmem:[#allocation8] sm:$0xff] %vm273, %v195
    %275 = vst.msk [vmem:[#allocation8 + $0x8] sm:$0xff] %vm273, %v200
    %276 = vst.msk [vmem:[#allocation8 + $0x10] sm:$0xff] %vm273, %v205
    %277 = vst.msk [vmem:[#allocation8 + $0x18] sm:$0xff] %vm273, %v210
    %278 = vst.msk [vmem:[#allocation8 + $0x20] sm:$0xff] %vm273, %v215
    %279 = vst.msk [vmem:[#allocation8 + $0x28] sm:$0xff] %vm273, %v220
    %280 = vst.msk [vmem:[#allocation8 + $0x30] sm:$0xff] %vm273, %v225
    %281 = vst.msk [vmem:[#allocation8 + $0x38] sm:$0xff] %vm273, %v230
    %282 = vst.msk [vmem:[#allocation8 + $0x40] sm:$0xff] %vm273, %v235
    %283 = vst.msk [vmem:[#allocation8 + $0x48] sm:$0xff] %vm273, %v240
    %284 = vst.msk [vmem:[#allocation8 + $0x50] sm:$0xff] %vm273, %v245
    %285 = vst.msk [vmem:[#allocation8 + $0x58] sm:$0xff] %vm273, %v250
    %286 = vst.msk [vmem:[#allocation8 + $0x60] sm:$0xff] %vm273, %v255
    %287 = vst.msk [vmem:[#allocation8 + $0x68] sm:$0xff] %vm273, %v260
    %288 = vst.msk [vmem:[#allocation8 + $0x70] sm:$0xff] %vm273, %v265
    %289 = vst.msk [vmem:[#allocation8 + $0x78] sm:$0xff] %vm273, %v270
    // Predicated region
    $region26: #{tpu_custom_call.1} parent=1 // pred_check
      _
    $region27: #{tpu_custom_call.1} parent=1 // pred_check_branch
      %291 = sbr.rel (0) target = $region29
    $region28: #{tpu_custom_call.1} parent=1 // pred_region
      %s293 = ssub.s32 2048, 2048
      %294 = vsyncadd [#allocation4], %s293
      %s295 = sshll.u32 [#allocation8], 4
      %s296 = int_to_ptr.vmem [resolvable:$true] %s295
      %301 = dma.vmem_to_hbm [thread:$0]  %s296, 2048, %s3, [#allocation4], 128, 128, 8
    $region29: #{tpu_custom_call.1} parent=1 // pred_fallthru
      _
    // Predicated region
    $region30: #{tpu_custom_call.1} parent=1 // pred_check
      _
    $region31: #{tpu_custom_call.1} parent=1 // pred_check_branch
      %303 = sbr.rel (0) target = $region33
    $region32: #{tpu_custom_call.1} parent=1 // pred_region
      %304 = dma.done [#allocation4], 2048
    $region33: #{tpu_custom_call.1} parent=1 // pred_fallthru
      _
    %305 = vsyncpa [#allocation3], 1
    %306 = vsyncpa [#allocation6], 1
    %307 = vsyncpa [#allocation4], 1

</llo_original>
